<compile_context>
chip_gen: v5e
topology: v5e:2x2
jax: 0.10.0
libtpu: 0.0.40
codegen_flags: <defaults>
</compile_context>

<pallas_src>
from functools import partial

import jax
import jax.numpy as jnp
from jax.experimental import pallas as pl
from jax.experimental.pallas import tpu as pltpu


_VMEM_LIMIT_BYTES = 64 * 1024 * 1024    # > v5e(16)/v6e(32) scoped defaults, <= v7x physical
_BLOCK_BUDGET_BYTES = 20 * 1024 * 1024  # target per-grid-step working set


# ----------------------------------------------------------------------------
# Kernels
# ----------------------------------------------------------------------------
def _softmax_rows_kernel(x_ref, o_ref):
    """Numerically stable softmax over the (whole) last axis of each row block."""
    x = x_ref[...]
    if x_ref.dtype == jnp.bfloat16:
        # Bulk elementwise work stays bf16 (bf16 VPU/EUP on v6e/v7x); the
        # reduction sum is accumulated in f32 for accuracy.
        m = jnp.max(x, axis=-1, keepdims=True)
        e = jnp.exp(x - m)
        s = jnp.sum(e.astype(jnp.float32), axis=-1, keepdims=True)
        inv = pl.reciprocal(s, approx=True).astype(jnp.bfloat16)
        o_ref[...] = (e * inv).astype(o_ref.dtype)
    else:
        xf = x.astype(jnp.float32)
        m = jnp.max(xf, axis=-1, keepdims=True)
        e = jnp.exp(xf - m)
        s = jnp.sum(e, axis=-1, keepdims=True)
        o_ref[...] = (e * pl.reciprocal(s, approx=True)).astype(o_ref.dtype)


def _softmax_stats_kernel(x_ref, m_ref, l_ref, m_sc, l_sc, *, cols, tile_c):
    """Pass 1 of the wide-axis fallback: per-row running max & sum-of-exp."""
    j = pl.program_id(1)
    neg_big = jnp.finfo(jnp.float32).min

    @pl.when(j == 0)
    def _():
        m_sc[...] = jnp.full_like(m_sc, neg_big)
        l_sc[...] = jnp.zeros_like(l_sc)

    x = x_ref[...].astype(jnp.float32)
    # Mask padded columns of the last (partial) column block.
    col_ids = j * tile_c + jax.lax.broadcasted_iota(jnp.int32, x.shape, 1)
    x = jnp.where(col_ids < cols, x, neg_big)

    m_old = m_sc[...]
    m_new = jnp.maximum(m_old, jnp.max(x, axis=-1, keepdims=True))
    l_sc[...] = (l_sc[...] * jnp.exp(m_old - m_new)
                 + jnp.sum(jnp.exp(x - m_new), axis=-1, keepdims=True))
    m_sc[...] = m_new

    @pl.when(j == pl.num_programs(1) - 1)
    def _():
        m_ref[...] = m_sc[...]
        l_ref[...] = l_sc[...]


def _softmax_normalize_kernel(x_ref, m_ref, l_ref, o_ref):
    """Pass 2 of the wide-axis fallback: exp(x - m) / l, column-tiled."""
    x = x_ref[...].astype(jnp.float32)
    e = jnp.exp(x - m_ref[...])
    o_ref[...] = (e * pl.reciprocal(l_ref[...], approx=True)).astype(o_ref.dtype)


# ----------------------------------------------------------------------------
# Wrappers
# ----------------------------------------------------------------------------
def _row_tile(cols, itemsize):
    # VMEM per row of a grid step:
    #   input + output blocks, double-buffered  -> 4 * itemsize * cols
    #   f32 intermediates (xf / e)              -> ~8 * cols
    per_row = cols * (4 * itemsize + 8)
    tile_r = _BLOCK_BUDGET_BYTES // max(per_row, 1)
    tile_r = min(1024, (tile_r // 8) * 8)
    return tile_r


def _softmax_single_pass(x2d, rows, cols, out_dtype, tile_r):
    tile_r = min(tile_r, rows)
    grid = (pl.cdiv(rows, tile_r),)
    itemsize = jnp.dtype(out_dtype).itemsize
    cost = pl.CostEstimate(
        flops=5 * rows * cols,
        transcendentals=rows * cols,
        bytes_accessed=2 * rows * cols * itemsize,
    )
    return pl.pallas_call(
        _softmax_rows_kernel,
        out_shape=jax.ShapeDtypeStruct((rows, cols), out_dtype),
        grid=grid,
        in_specs=[pl.BlockSpec((tile_r, cols), lambda i: (i, 0))],
        out_specs=pl.BlockSpec((tile_r, cols), lambda i: (i, 0)),
        compiler_params=pltpu.CompilerParams(
            dimension_semantics=("parallel",),
            vmem_limit_bytes=_VMEM_LIMIT_BYTES,
        ),
        cost_estimate=cost,
    )(x2d)


def _softmax_two_pass(x2d, rows, cols, out_dtype, tile_c=None):
    """Column-tiled online softmax for axes too wide for one row block."""
    if tile_c is None:
        tile_c = 4096
    tile_c = min(tile_c, cols)
    if tile_c != cols:
        tile_c = max(128, (tile_c // 128) * 128)

    tile_r = rows if rows <= 256 else 256  # 256 is a multiple of 8

    grid = (pl.cdiv(rows, tile_r), pl.cdiv(cols, tile_c))
    itemsize = jnp.dtype(out_dtype).itemsize

    # Pass 1: per-row softmax statistics (running max m, running sum l).
    m, l = pl.pallas_call(
        partial(_softmax_stats_kernel, cols=cols, tile_c=tile_c),
        out_shape=(jax.ShapeDtypeStruct((rows, 1), jnp.float32),
                   jax.ShapeDtypeStruct((rows, 1), jnp.float32)),
        grid=grid,
        in_specs=[pl.BlockSpec((tile_r, tile_c), lambda i, j: (i, j))],
        out_specs=[pl.BlockSpec((tile_r, 1), lambda i, j: (i, 0)),
                   pl.BlockSpec((tile_r, 1), lambda i, j: (i, 0))],
        scratch_shapes=[pltpu.VMEM((tile_r, 1), jnp.float32),
                        pltpu.VMEM((tile_r, 1), jnp.float32)],
        compiler_params=pltpu.CompilerParams(
            dimension_semantics=("parallel", "arbitrary"),
            vmem_limit_bytes=_VMEM_LIMIT_BYTES,
        ),
        cost_estimate=pl.CostEstimate(
            flops=4 * rows * cols,
            transcendentals=rows * cols,
            bytes_accessed=rows * cols * itemsize,
        ),
    )(x2d)

    # Pass 2: elementwise normalize.
    return pl.pallas_call(
        _softmax_normalize_kernel,
        out_shape=jax.ShapeDtypeStruct((rows, cols), out_dtype),
        grid=grid,
        in_specs=[pl.BlockSpec((tile_r, tile_c), lambda i, j: (i, j)),
                  pl.BlockSpec((tile_r, 1), lambda i, j: (i, 0)),
                  pl.BlockSpec((tile_r, 1), lambda i, j: (i, 0))],
        out_specs=pl.BlockSpec((tile_r, tile_c), lambda i, j: (i, j)),
        compiler_params=pltpu.CompilerParams(
            dimension_semantics=("parallel", "arbitrary"),
            vmem_limit_bytes=_VMEM_LIMIT_BYTES,
        ),
        cost_estimate=pl.CostEstimate(
            flops=2 * rows * cols,
            transcendentals=rows * cols,
            bytes_accessed=2 * rows * cols * itemsize,
        ),
    )(x2d, m, l)


def onnx_softmax_v1_v11(x: jax.Array, axis: int = 1, *,
                        _force_two_pass: bool = False,
                        _two_pass_tile_c=None) -> jax.Array:
    """ONNX Softmax (opset 1/11): softmax over dims flattened from `axis`."""
    shape = x.shape
    ndim = max(len(shape), 1)
    axis = axis % ndim

    rows = 1
    for d in shape[:axis]:
        rows *= d
    cols = 1
    for d in shape[axis:]:
        cols *= d

    x2d = jnp.reshape(x, (rows, cols))
    itemsize = jnp.dtype(x.dtype).itemsize

    # TODO(synk): for tiny / non-128-multiple `cols` with huge `rows`, transpose
    # so rows map to lanes (lane-dense stores) and reduce along sublanes.

    tile_r = _row_tile(cols, itemsize)
    if _force_two_pass or tile_r < 8:
        out2d = _softmax_two_pass(x2d, rows, cols, x.dtype, _two_pass_tile_c)
    else:
        out2d = _softmax_single_pass(x2d, rows, cols, x.dtype, tile_r)

    return jnp.reshape(out2d, shape)


# ----------------------------------------------------------------------------
# Reference + self-test
# ----------------------------------------------------------------------------
def _reference_softmax(x: jax.Array, axis: int = 1) -> jax.Array:
    shape = x.shape
    axis = axis % len(shape)
    rows = 1
    for d in shape[:axis]:
        rows *= d
    x2d = jnp.reshape(x, (rows, -1)).astype(jnp.float32)
    return jnp.reshape(jax.nn.softmax(x2d, axis=-1), shape).astype(x.dtype)


if __name__ == "__main__":
    key = jax.random.PRNGKey(0)
    k1, k2 = jax.random.split(key)

    # Primary test: NCHW input, ONNX default axis=1 (softmax over C*H*W = 1024).
    x = jax.random.normal(k1, (2, 4, 16, 16), dtype=jnp.float32)
    out = jax.block_until_ready(onnx_softmax_v1_v11(x, axis=1))
    ref = _reference_softmax(x, axis=1)
    assert out.shape == x.shape and out.dtype == x.dtype
    assert jnp.allclose(out, ref, atol=2e-3, rtol=2e-3)

    # bf16 path (bf16 exp/mul, f32 sum accumulation).
    xb = x.astype(jnp.bfloat16)
    outb = jax.block_until_ready(onnx_softmax_v1_v11(xb, axis=1))
    refb = _reference_softmax(xb, axis=1)
    assert outb.dtype == jnp.bfloat16
    assert jnp.allclose(outb.astype(jnp.float32), refb.astype(jnp.float32),
                        atol=2e-2, rtol=2e-2)

    # Exercise the column-tiled two-pass fallback (forced at a small shape).
    x2 = jax.random.normal(k2, (4, 8, 8, 32), dtype=jnp.float32)  # axis=2 -> rows=32, cols=256
    out2 = jax.block_until_ready(
        onnx_softmax_v1_v11(x2, axis=2, _force_two_pass=True, _two_pass_tile_c=128))
    ref2 = _reference_softmax(x2, axis=2)
    assert jnp.allclose(out2, ref2, atol=2e-3, rtol=2e-3)

    print("KERNEL_OK")
</pallas_src>

<mosaic_0001>
module attributes {stable_mosaic.version = 11 : i64} {
  func.func @_softmax_rows_kernel(%arg0: i32, %arg1: memref<2x1024xf32, #tpu.memory_space<vmem>>, %arg2: memref<2x1024xf32, #tpu.memory_space<vmem>>) attributes {dimension_semantics = [#tpu.dimension_semantics<parallel>], iteration_bounds = array<i64: 1>, scalar_prefetch = 0 : i64, scratch_operands = 0 : i64, tpu.core_type = #tpu.core_type<tc>, window_params = [{transform_indices = @transform_0, window_bounds = array<i64: 2, 1024>}, {transform_indices = @transform_1, window_bounds = array<i64: 2, 1024>}]} {
    %c0 = arith.constant 0 : index
    %c0_0 = arith.constant 0 : index
    %0 = vector.load %arg1[%c0, %c0_0] : memref<2x1024xf32, #tpu.memory_space<vmem>>, vector<2x1024xf32>
    %cst = arith.constant dense<0xFF800000> : vector<2xf32>
    %1 = vector.multi_reduction <maximumf>, %0, %cst [1] : vector<2x1024xf32> to vector<2xf32>
    %2 = vector.shape_cast %1 : vector<2xf32> to vector<2x1xf32>
    %3 = vector.broadcast %2 : vector<2x1xf32> to vector<2x1024xf32>
    %4 = arith.subf %0, %3 : vector<2x1024xf32>
    %5 = math.exp %4 : vector<2x1024xf32>
    %cst_1 = arith.constant dense<0.000000e+00> : vector<2xf32>
    %6 = vector.multi_reduction <add>, %5, %cst_1 [1] : vector<2x1024xf32> to vector<2xf32>
    %7 = vector.shape_cast %6 : vector<2xf32> to vector<2x1xf32>
    %8 = tpu.reciprocal %7 {approx = true} : vector<2x1xf32> -> vector<2x1xf32>
    %9 = vector.broadcast %8 : vector<2x1xf32> to vector<2x1024xf32>
    %10 = arith.mulf %5, %9 : vector<2x1024xf32>
    %c0_2 = arith.constant 0 : index
    %c0_3 = arith.constant 0 : index
    %11 = vector.load %arg2[%c0_2, %c0_3] : memref<2x1024xf32, #tpu.memory_space<vmem>>, vector<2x1024xf32>
    tpu.vector_store %arg2[%c0_2, %c0_3], %10 {strides = array<i32>} : memref<2x1024xf32, #tpu.memory_space<vmem>>, vector<2x1024xf32>,
    return
  }
  func.func @transform_0(%arg0: i32) -> (i32, i32) {
    %c0_i32 = arith.constant 0 : i32
    %c0_i32_0 = arith.constant 0 : i32
    return %arg0, %c0_i32 : i32, i32
  }
  func.func @transform_1(%arg0: i32) -> (i32, i32) {
    %c0_i32 = arith.constant 0 : i32
    %c0_i32_0 = arith.constant 0 : i32
    return %arg0, %c0_i32 : i32, i32
  }
}

</mosaic_0001>

<llo_original>
// kernel: tpu_custom_call.1
$region0: #{tpu_custom_call.1}
  #allocation0 [shape = 'u32[]', space=smem, size = 0x4, offset = 0x4, fixed_abs, tag = 'smem constant byte address 0x4 - core index']
  #allocation1 [shape = 'u32[72,128]{1,0:T(1,128)}', space=vmem, size = 0x9000, scoped, tag = 'internal scratch']
  %s0 = inlined_call_operand.hbm [shape: f32[2,1024], index: 0, kind: input, shape index: {}]
  %s1 = inlined_call_operand.hbm [shape: f32[2,1024], index: 1, kind: output, shape index: {}]
  %s2 = sld [smem:[#allocation0]]
  $region18: #{tpu_custom_call.1} parent=0
    _
  %s4 = ssub.s32 1, %s2
  %s5 = scalar_select 0, %s4, %s2
  $region1: #{tpu_custom_call.1} parent=0
    #allocation2 [shape = 'u8[8192]{0}', space=vmem, size = 0x2000, scoped, tag = 'input window, operand 0, single buffered']
    #allocation3 [shape = 's32[1]{0}', space=sflag, size = 0x4, scoped, tag = 'scoped memory for tpu_custom_call.1']
    #allocation4 [shape = 's32[1]{0}', space=sflag, size = 0x4, scoped, tag = 'scoped memory for tpu_custom_call.1']
    #allocation5 [shape = 'u8[8192]{0}', space=vmem, size = 0x2000, scoped, tag = 'output window, operand 0, single buffered']
    %6 = vsyncpa [#allocation3], 0
    %7 = vsyncpa [#allocation4], 0
    // Predicated region
    $region2: #{tpu_custom_call.1} parent=1 // pred_check
      _
    $region3: #{tpu_custom_call.1} parent=1 // pred_check_branch
      %9 = sbr.rel (0) target = $region5
    $region4: #{tpu_custom_call.1} parent=1 // pred_region
      %11 = vsyncadd [#allocation3], 0
      %s13 = sshll.u32 %s0, 4
      %s14 = int_to_ptr.hbm [resolvable:$true] %s13
      %s15 = sshll.u32 [#allocation2], 4
      %s16 = int_to_ptr.vmem [resolvable:$true] %s15
      %18 = dma.hbm_to_vmem [thread:$0]  %s14, 256, %s16, [#allocation3]
    $region5: #{tpu_custom_call.1} parent=1 // pred_fallthru
      _
    // Predicated region
    $region6: #{tpu_custom_call.1} parent=1 // pred_check
      _
    $region7: #{tpu_custom_call.1} parent=1 // pred_check_branch
      %20 = sbr.rel (0) target = $region9
    $region8: #{tpu_custom_call.1} parent=1 // pred_region
      %22 = dma.done [#allocation3], 256
    $region9: #{tpu_custom_call.1} parent=1 // pred_fallthru
      _
    %v23 = vld [vmem:[#allocation2] sm:$0xff]
    %v24 = vld [vmem:[#allocation2 + $0x8] sm:$0xff]
    %27 = vst [vmem:[#allocation1] ss:$4 sm:$0xff] %v23
    %s28 = scalar_lea.vmem [#allocation1], 32
    %29 = vst [vmem:[%s28] ss:$4 sm:$0xff] %v24
    %v30 = vld.sshfl [vmem:[#allocation1] sm:$0xff pattern:$0x73625140]
    %v31 = vld.sshfl [vmem:[#allocation1 + $0x8] sm:$0xff pattern:$0x73625140]
    %v32 = vld.sshfl [vmem:[#allocation1 + $0x10] sm:$0xff pattern:$0x73625140]
    %v33 = vld.sshfl [vmem:[#allocation1 + $0x18] sm:$0xff pattern:$0x73625140]
    %v34 = vld.sshfl [vmem:[#allocation1 + $0x20] sm:$0xff pattern:$0x73625140]
    %v35 = vld.sshfl [vmem:[#allocation1 + $0x28] sm:$0xff pattern:$0x73625140]
    %v36 = vld.sshfl [vmem:[#allocation1 + $0x30] sm:$0xff pattern:$0x73625140]
    %v37 = vld.sshfl [vmem:[#allocation1 + $0x38] sm:$0xff pattern:$0x73625140]
    %vm46 = vcmask 1041408
    %v47 = vsel %vm46, %v30, -inf
    %v48 = vsel %vm46, %v31, -inf
    %v49 = vsel %vm46, %v32, -inf
    %v50 = vsel %vm46, %v33, -inf
    %v51 = vsel %vm46, %v34, -inf
    %v52 = vmax.f32 %v47, %v51
    %v53 = vsel %vm46, %v35, -inf
    %v54 = vmax.f32 %v48, %v53
    %v55 = vsel %vm46, %v36, -inf
    %v56 = vmax.f32 %v49, %v55
    %v57 = vsel %vm46, %v37, -inf
    %v58 = vmax.f32 %v50, %v57
    %v59 = vmax.f32 %v52, %v54
    %v60 = vmax.f32 %v56, %v58
    %v61 = vmax.f32 %v59, %v60
    %62 = vmax.xlane.f32.xlu0 %v61
    %v63 = vpop.xlane.xlu0 %62
    %v66 = vunpack.c.l.s4 269488144
    %v67 = vunpack.c.0.s8 %v66
    %v68 = vperm.slane %v63, %v67
    %v70 = vsub.f32 %v23, %v68
    %v71 = vsub.f32 %v24, %v68
    %v72 = vmul.f32 %v70, 1.442695
    %v73 = vpow.pop %v72
    %v74 = vmul.f32 %v71, 1.442695
    %v75 = vpow.pop %v74
    %78 = vst [vmem:[#allocation1] ss:$4 sm:$0xff] %v73
    %s79 = scalar_lea.vmem [#allocation1], 32
    %80 = vst [vmem:[%s79] ss:$4 sm:$0xff] %v75
    %v81 = vld.sshfl [vmem:[#allocation1] sm:$0xff pattern:$0x73625140]
    %v82 = vld.sshfl [vmem:[#allocation1 + $0x8] sm:$0xff pattern:$0x73625140]
    %v83 = vld.sshfl [vmem:[#allocation1 + $0x10] sm:$0xff pattern:$0x73625140]
    %v84 = vld.sshfl [vmem:[#allocation1 + $0x18] sm:$0xff pattern:$0x73625140]
    %v85 = vld.sshfl [vmem:[#allocation1 + $0x20] sm:$0xff pattern:$0x73625140]
    %v86 = vld.sshfl [vmem:[#allocation1 + $0x28] sm:$0xff pattern:$0x73625140]
    %v87 = vld.sshfl [vmem:[#allocation1 + $0x30] sm:$0xff pattern:$0x73625140]
    %v88 = vld.sshfl [vmem:[#allocation1 + $0x38] sm:$0xff pattern:$0x73625140]
    %v97 = vsel %vm46, %v81, 0.0
    %v98 = vsel %vm46, %v82, 0.0
    %v99 = vadd.f32 %v97, %v98
    %v100 = vsel %vm46, %v83, 0.0
    %v101 = vadd.f32 %v99, %v100
    %v102 = vsel %vm46, %v84, 0.0
    %v103 = vadd.f32 %v101, %v102
    %v104 = vsel %vm46, %v85, 0.0
    %v105 = vadd.f32 %v103, %v104
    %v106 = vsel %vm46, %v86, 0.0
    %v107 = vadd.f32 %v105, %v106
    %v108 = vsel %vm46, %v87, 0.0
    %v109 = vadd.f32 %v107, %v108
    %v110 = vsel %vm46, %v88, 0.0
    %v111 = vadd.f32 %v109, %v110
    %112 = vadd.xlane.f32.xlu0 %v111
    %v113 = vpop.xlane.xlu0 %112
    %v114 = vrcp.pop %v113
    %v117 = vunpack.c.l.s4 269488144
    %v118 = vunpack.c.0.s8 %v117
    %v119 = vperm.slane %v114, %v118
    %v121 = vmul.f32 %v73, %v119
    %v122 = vmul.f32 %v75, %v119
    %123 = vst [vmem:[#allocation5] sm:$0xff] %v121
    %124 = vst [vmem:[#allocation5 + $0x8] sm:$0xff] %v122
    // Predicated region
    $region10: #{tpu_custom_call.1} parent=1 // pred_check
      _
    $region11: #{tpu_custom_call.1} parent=1 // pred_check_branch
      %126 = sbr.rel (0) target = $region13
    $region12: #{tpu_custom_call.1} parent=1 // pred_region
      %128 = vsyncadd [#allocation4], 0
      %s130 = sshll.u32 [#allocation5], 4
      %s131 = int_to_ptr.vmem [resolvable:$true] %s130
      %s132 = sshll.u32 %s1, 4
      %s133 = int_to_ptr.hbm [resolvable:$true] %s132
      %135 = dma.vmem_to_hbm [thread:$0]  %s131, 256, %s133, [#allocation4]
    $region13: #{tpu_custom_call.1} parent=1 // pred_fallthru
      _
    // Predicated region
    $region14: #{tpu_custom_call.1} parent=1 // pred_check
      _
    $region15: #{tpu_custom_call.1} parent=1 // pred_check_branch
      %137 = sbr.rel (0) target = $region17
    $region16: #{tpu_custom_call.1} parent=1 // pred_region
      %139 = dma.done [#allocation4], 256
    $region17: #{tpu_custom_call.1} parent=1 // pred_fallthru
      _
    %140 = vsyncpa [#allocation3], 1
    %141 = vsyncpa [#allocation4], 1

</llo_original>
